<compile_context>
chip_gen: v7x
topology: tpu7x:2x2x1
jax: 0.10.0
libtpu: 0.0.40
codegen_flags: <defaults>
</compile_context>

<pallas_src>
import functools

import jax
import jax.numpy as jnp
from jax.experimental import pallas as pl
from jax.experimental.pallas import tpu as pltpu

NUM_CHARACTERS = 32
NUM_ACTION_STATES = 383
STATE_SIZE = 10
CHARACTER_DIM = 10
ACTION_STATE_DIM = 32
HIDDEN_DIM = 64


# --------------------------------------------------------------------------
# Kernel: one batch tile -> 3 small matmuls + fused bias, f32 accumulation.
# --------------------------------------------------------------------------
def player_layer_kernel(xc_ref, xa_ref, xs_ref, wc_ref, wa_ref, ws_ref, b_ref, o_ref):
    f32 = jnp.float32
    # Largest stream first so its MXU push overlaps the smaller loads.
    acc = jnp.dot(xa_ref[...], wa_ref[...], preferred_element_type=f32)
    acc = acc + jnp.dot(xc_ref[...], wc_ref[...], preferred_element_type=f32)
    acc = acc + jnp.dot(xs_ref[...], ws_ref[...], preferred_element_type=f32)
    acc = acc + b_ref[...].astype(f32)
    o_ref[...] = acc.astype(o_ref.dtype)


# --------------------------------------------------------------------------
# One-time param prep: fold the six Linears (exact, since there is no
# activation function anywhere in the module).  Do this ONCE, not per call.
# --------------------------------------------------------------------------
def fold_params(params, dtype=jnp.float32):
    wp1 = params["wp1"]
    wp1c = wp1[:CHARACTER_DIM]
    wp1a = wp1[CHARACTER_DIM:CHARACTER_DIM + ACTION_STATE_DIM]
    wp1s = wp1[CHARACTER_DIM + ACTION_STATE_DIM:]
    wp2 = params["wp2"]

    w_c = params["wc1"] @ params["wc2"] @ wp1c @ wp2            # [32,  out]
    w_a = params["wa1"] @ params["wa2"] @ wp1a @ wp2            # [383, out]
    w_s = wp1s @ wp2                                            # [10,  out]
    b = (
        (params["bc1"] @ params["wc2"] + params["bc2"]) @ wp1c
        + (params["ba1"] @ params["wa2"] + params["ba2"]) @ wp1a
        + params["bp1"]
    ) @ wp2 + params["bp2"]                                     # [1, out]

    return {
        "w_c": w_c.astype(dtype),
        "w_a": w_a.astype(dtype),
        "w_s": w_s.astype(dtype),
        "b": b.astype(dtype),
    }


# --------------------------------------------------------------------------
# Wrapper: batch-tiled grid, weights VMEM-resident, "parallel" semantics.
# --------------------------------------------------------------------------
@functools.partial(jax.jit, static_argnames=("block_b",))
def player_layer_forward(x_character, x_action_state, x_state, folded, *, block_b=2048):
    B = x_character.shape[0]
    out_dim = folded["w_c"].shape[1]
    compute_dtype = folded["w_c"].dtype

    xc = x_character.astype(compute_dtype)
    xa = x_action_state.astype(compute_dtype)
    xs = x_state.astype(compute_dtype)

    # Full-array block for small batches; otherwise tile (batch tile kept a
    # multiple of 8 for clean sublane tiling; Pallas masks the ragged tail).
    if B <= block_b:
        tb = B
    else:
        tb = max(8, (block_b // 8) * 8)
    grid = (pl.cdiv(B, tb),)

    def x_spec(f):
        return pl.BlockSpec((tb, f), lambda i: (i, 0))

    def w_spec(r, c):
        # Constant index_map -> same block every step -> stays VMEM-resident.
        return pl.BlockSpec((r, c), lambda i: (0, 0))

    flops = 2 * B * out_dim * (NUM_CHARACTERS + NUM_ACTION_STATES + STATE_SIZE)
    bytes_accessed = (
        xc.size * xc.dtype.itemsize
        + xa.size * xa.dtype.itemsize
        + xs.size * xs.dtype.itemsize
        + B * out_dim * 4
    )

    return pl.pallas_call(
        player_layer_kernel,
        out_shape=jax.ShapeDtypeStruct((B, out_dim), jnp.float32),
        grid=grid,
        in_specs=[
            x_spec(NUM_CHARACTERS),
            x_spec(NUM_ACTION_STATES),
            x_spec(STATE_SIZE),
            w_spec(NUM_CHARACTERS, out_dim),
            w_spec(NUM_ACTION_STATES, out_dim),
            w_spec(STATE_SIZE, out_dim),
            w_spec(1, out_dim),
        ],
        out_specs=pl.BlockSpec((tb, out_dim), lambda i: (i, 0)),
        compiler_params=pltpu.CompilerParams(
            dimension_semantics=("parallel",),
        ),
        cost_estimate=pl.CostEstimate(
            flops=flops, transcendentals=0, bytes_accessed=bytes_accessed),
    )(xc, xa, xs, folded["w_c"], folded["w_a"], folded["w_s"], folded["b"])


# --------------------------------------------------------------------------
# Synthetic init + pure-JAX reference (mirrors the PyTorch forward exactly).
# Weights are [in, out] (x @ W + b == x @ W_pt.T + b), biases [1, out].
# --------------------------------------------------------------------------
def init_params(key, output_dim):
    keys = jax.random.split(key, 12)

    def w(k, shape, fan_in):
        return (jax.random.normal(k, shape, jnp.float32) / jnp.sqrt(fan_in)).astype(jnp.float32)

    concat_dim = CHARACTER_DIM + ACTION_STATE_DIM + STATE_SIZE  # 52
    return {
        "wc1": w(keys[0], (NUM_CHARACTERS, 32), NUM_CHARACTERS),
        "bc1": w(keys[1], (1, 32), 32),
        "wc2": w(keys[2], (32, CHARACTER_DIM), 32),
        "bc2": w(keys[3], (1, CHARACTER_DIM), 32),
        "wa1": w(keys[4], (NUM_ACTION_STATES, 64), NUM_ACTION_STATES),
        "ba1": w(keys[5], (1, 64), 64),
        "wa2": w(keys[6], (64, ACTION_STATE_DIM), 64),
        "ba2": w(keys[7], (1, ACTION_STATE_DIM), 64),
        "wp1": w(keys[8], (concat_dim, HIDDEN_DIM), concat_dim),
        "bp1": w(keys[9], (1, HIDDEN_DIM), HIDDEN_DIM),
        "wp2": w(keys[10], (HIDDEN_DIM, output_dim), HIDDEN_DIM),
        "bp2": w(keys[11], (1, output_dim), output_dim),
    }


def reference_forward(xc, xa, xs, params):
    c = (xc @ params["wc1"] + params["bc1"]) @ params["wc2"] + params["bc2"]
    a = (xa @ params["wa1"] + params["ba1"]) @ params["wa2"] + params["ba2"]
    x = jnp.concatenate([c, a, xs], axis=1)
    h = x @ params["wp1"] + params["bp1"]
    return h @ params["wp2"] + params["bp2"]


if __name__ == "__main__":
    key = jax.random.PRNGKey(0)
    k_xc, k_xa, k_xs, k_p = jax.random.split(key, 4)

    B = 64
    OUTPUT_DIM = 16

    x_character = jax.random.normal(k_xc, (B, NUM_CHARACTERS), jnp.float32)
    x_action_state = jax.random.normal(k_xa, (B, NUM_ACTION_STATES), jnp.float32)
    x_state = jax.random.normal(k_xs, (B, STATE_SIZE), jnp.float32)

    params = init_params(k_p, OUTPUT_DIM)
    ref = reference_forward(x_character, x_action_state, x_state, params)

    folded_f32 = fold_params(params, jnp.float32)

    # f32 path, single full-batch block (default block_b).
    out_full = player_layer_forward(x_character, x_action_state, x_state, folded_f32)
    out_full = jax.block_until_ready(out_full)
    assert out_full.shape == (B, OUTPUT_DIM)
    assert jnp.allclose(out_full, ref, atol=2e-3, rtol=2e-3), "f32 (full block) mismatch"

    # f32 path, block_b=16 -> grid of 4 batch tiles to exercise the pipeline.
    out_f32 = player_layer_forward(
        x_character, x_action_state, x_state, folded_f32, block_b=16)
    out_f32 = jax.block_until_ready(out_f32)
    assert out_f32.shape == (B, OUTPUT_DIM)
    assert jnp.allclose(out_f32, ref, atol=2e-3, rtol=2e-3), "f32 (tiled) mismatch"

    # bf16-streaming path (bf16 weights/activations, f32 MXU accumulation).
    folded_bf16 = fold_params(params, jnp.bfloat16)
    out_bf16 = player_layer_forward(
        x_character, x_action_state, x_state, folded_bf16, block_b=16)
    out_bf16 = jax.block_until_ready(out_bf16)
    assert out_bf16.shape == (B, OUTPUT_DIM)
    assert jnp.allclose(out_bf16, ref, atol=0.15, rtol=0.15), "bf16 mismatch vs. reference"

    print("KERNEL_OK")
</pallas_src>

<mosaic_0001>
module attributes {stable_mosaic.version = 11 : i64} {
  func.func @player_layer_kernel(%arg0: i32, %arg1: memref<64x32xf32, #tpu.memory_space<vmem>>, %arg2: memref<64x383xf32, #tpu.memory_space<vmem>>, %arg3: memref<64x10xf32, #tpu.memory_space<vmem>>, %arg4: memref<32x16xf32, #tpu.memory_space<vmem>>, %arg5: memref<383x16xf32, #tpu.memory_space<vmem>>, %arg6: memref<10x16xf32, #tpu.memory_space<vmem>>, %arg7: memref<1x16xf32, #tpu.memory_space<vmem>>, %arg8: memref<64x16xf32, #tpu.memory_space<vmem>>) attributes {dimension_semantics = [#tpu.dimension_semantics<parallel>], iteration_bounds = array<i64: 1>, scalar_prefetch = 0 : i64, scratch_operands = 0 : i64, tpu.core_type = #tpu.core_type<tc>, window_params = [{transform_indices = @transform_0, window_bounds = array<i64: 64, 32>}, {transform_indices = @transform_1, window_bounds = array<i64: 64, 383>}, {transform_indices = @transform_2, window_bounds = array<i64: 64, 10>}, {pipeline_mode = #tpu.pipeline_mode<synchronous>, transform_indices = @transform_3, window_bounds = array<i64: 32, 16>}, {pipeline_mode = #tpu.pipeline_mode<synchronous>, transform_indices = @transform_4, window_bounds = array<i64: 383, 16>}, {pipeline_mode = #tpu.pipeline_mode<synchronous>, transform_indices = @transform_5, window_bounds = array<i64: 10, 16>}, {pipeline_mode = #tpu.pipeline_mode<synchronous>, transform_indices = @transform_6, window_bounds = array<i64: 1, 16>}, {transform_indices = @transform_7, window_bounds = array<i64: 64, 16>}]} {
    %c0 = arith.constant 0 : index
    %c0_0 = arith.constant 0 : index
    %0 = vector.load %arg2[%c0, %c0_0] : memref<64x383xf32, #tpu.memory_space<vmem>>, vector<64x383xf32>
    %c0_1 = arith.constant 0 : index
    %c0_2 = arith.constant 0 : index
    %1 = vector.load %arg5[%c0_1, %c0_2] : memref<383x16xf32, #tpu.memory_space<vmem>>, vector<383x16xf32>
    %cst = arith.constant dense<0.000000e+00> : vector<64x16xf32>
    %2 = tpu.matmul %0, %1, %cst {dimension_numbers = #tpu.dot_dimension_numbers<[1], [0], [0], [1], [0, 0, 1, 1], [], []>} : vector<64x383xf32>, vector<383x16xf32>, vector<64x16xf32> -> vector<64x16xf32>
    %c0_3 = arith.constant 0 : index
    %c0_4 = arith.constant 0 : index
    %3 = vector.load %arg1[%c0_3, %c0_4] : memref<64x32xf32, #tpu.memory_space<vmem>>, vector<64x32xf32>
    %c0_5 = arith.constant 0 : index
    %c0_6 = arith.constant 0 : index
    %4 = vector.load %arg4[%c0_5, %c0_6] : memref<32x16xf32, #tpu.memory_space<vmem>>, vector<32x16xf32>
    %cst_7 = arith.constant dense<0.000000e+00> : vector<64x16xf32>
    %5 = tpu.matmul %3, %4, %cst_7 {dimension_numbers = #tpu.dot_dimension_numbers<[1], [0], [0], [1], [0, 0, 1, 1], [], []>} : vector<64x32xf32>, vector<32x16xf32>, vector<64x16xf32> -> vector<64x16xf32>
    %6 = arith.addf %2, %5 : vector<64x16xf32>
    %c0_8 = arith.constant 0 : index
    %c0_9 = arith.constant 0 : index
    %7 = vector.load %arg3[%c0_8, %c0_9] : memref<64x10xf32, #tpu.memory_space<vmem>>, vector<64x10xf32>
    %c0_10 = arith.constant 0 : index
    %c0_11 = arith.constant 0 : index
    %8 = vector.load %arg6[%c0_10, %c0_11] : memref<10x16xf32, #tpu.memory_space<vmem>>, vector<10x16xf32>
    %cst_12 = arith.constant dense<0.000000e+00> : vector<64x16xf32>
    %9 = tpu.matmul %7, %8, %cst_12 {dimension_numbers = #tpu.dot_dimension_numbers<[1], [0], [0], [1], [0, 0, 1, 1], [], []>} : vector<64x10xf32>, vector<10x16xf32>, vector<64x16xf32> -> vector<64x16xf32>
    %10 = arith.addf %6, %9 : vector<64x16xf32>
    %c0_13 = arith.constant 0 : index
    %c0_14 = arith.constant 0 : index
    %11 = vector.load %arg7[%c0_13, %c0_14] : memref<1x16xf32, #tpu.memory_space<vmem>>, vector<1x16xf32>
    %12 = vector.broadcast %11 : vector<1x16xf32> to vector<64x16xf32>
    %13 = arith.addf %10, %12 : vector<64x16xf32>
    %c0_15 = arith.constant 0 : index
    %c0_16 = arith.constant 0 : index
    %14 = vector.load %arg8[%c0_15, %c0_16] : memref<64x16xf32, #tpu.memory_space<vmem>>, vector<64x16xf32>
    tpu.vector_store %arg8[%c0_15, %c0_16], %13 {strides = array<i32>} : memref<64x16xf32, #tpu.memory_space<vmem>>, vector<64x16xf32>,
    return
  }
  func.func @transform_0(%arg0: i32) -> (i32, i32) {
    %c0_i32 = arith.constant 0 : i32
    %c0_i32_0 = arith.constant 0 : i32
    return %arg0, %c0_i32 : i32, i32
  }
  func.func @transform_1(%arg0: i32) -> (i32, i32) {
    %c0_i32 = arith.constant 0 : i32
    %c0_i32_0 = arith.constant 0 : i32
    return %arg0, %c0_i32 : i32, i32
  }
  func.func @transform_2(%arg0: i32) -> (i32, i32) {
    %c0_i32 = arith.constant 0 : i32
    %c0_i32_0 = arith.constant 0 : i32
    return %arg0, %c0_i32 : i32, i32
  }
  func.func @transform_3(%arg0: i32) -> (i32, i32) {
    %c0_i32 = arith.constant 0 : i32
    %c0_i32_0 = arith.constant 0 : i32
    %c0_i32_1 = arith.constant 0 : i32
    return %c0_i32, %c0_i32_0 : i32, i32
  }
  func.func @transform_4(%arg0: i32) -> (i32, i32) {
    %c0_i32 = arith.constant 0 : i32
    %c0_i32_0 = arith.constant 0 : i32
    %c0_i32_1 = arith.constant 0 : i32
    return %c0_i32, %c0_i32_0 : i32, i32
  }
  func.func @transform_5(%arg0: i32) -> (i32, i32) {
    %c0_i32 = arith.constant 0 : i32
    %c0_i32_0 = arith.constant 0 : i32
    %c0_i32_1 = arith.constant 0 : i32
    return %c0_i32, %c0_i32_0 : i32, i32
  }
  func.func @transform_6(%arg0: i32) -> (i32, i32) {
    %c0_i32 = arith.constant 0 : i32
    %c0_i32_0 = arith.constant 0 : i32
    %c0_i32_1 = arith.constant 0 : i32
    return %c0_i32, %c0_i32_0 : i32, i32
  }
  func.func @transform_7(%arg0: i32) -> (i32, i32) {
    %c0_i32 = arith.constant 0 : i32
    %c0_i32_0 = arith.constant 0 : i32
    return %arg0, %c0_i32 : i32, i32
  }
}

</mosaic_0001>

<llo_original>
// kernel: player_layer_forward.1
$region0: #{player_layer_forward.1}
  #allocation0 [shape = 'u32[]', space=smem, size = 0x4, offset = 0x4, fixed_abs, tag = 'smem constant byte address 0x4 - core index']
  #allocation1 [shape = 'u32[144,128]{1,0:T(1,128)}', space=vmem, size = 0x12000, scoped, tag = 'internal scratch']
  %s0 = inlined_call_operand.vmem [shape: f32[64,32], index: 0, kind: input, shape index: {}]
  %s1 = inlined_call_operand.vmem [shape: f32[64,383], index: 1, kind: input, shape index: {}]
  %s2 = inlined_call_operand.vmem [shape: f32[64,10], index: 2, kind: input, shape index: {}]
  %s3 = inlined_call_operand.vmem [shape: f32[32,16], index: 3, kind: input, shape index: {}]
  %s4 = inlined_call_operand.vmem [shape: f32[383,16], index: 4, kind: input, shape index: {}]
  %s5 = inlined_call_operand.vmem [shape: f32[10,16], index: 5, kind: input, shape index: {}]
  %s6 = inlined_call_operand.vmem [shape: f32[1,16], index: 6, kind: input, shape index: {}]
  %s7 = inlined_call_operand.vmem [shape: f32[64,16], index: 7, kind: output, shape index: {}]
  %s8 = sld [smem:[#allocation0]]
  $region38: #{player_layer_forward.1} parent=0
    _
  %s10 = ssub.s32 1, %s8
  %s11 = scalar_select 0, %s10, %s8
  // Predicated region
  $region2: #{player_layer_forward.1} parent=0 // pred_check
    _
  $region3: #{player_layer_forward.1} parent=0 // pred_check_branch
    %13 = sbr.rel (0) target = $region5
  $region4: #{player_layer_forward.1} parent=0 // pred_region
    _
  $region5: #{player_layer_forward.1} parent=0 // pred_fallthru
    _
  // Predicated region
  $region6: #{player_layer_forward.1} parent=0 // pred_check
    _
  $region7: #{player_layer_forward.1} parent=0 // pred_check_branch
    %15 = sbr.rel (0) target = $region9
  $region8: #{player_layer_forward.1} parent=0 // pred_region
    _
  $region9: #{player_layer_forward.1} parent=0 // pred_fallthru
    _
  // Predicated region
  $region10: #{player_layer_forward.1} parent=0 // pred_check
    _
  $region11: #{player_layer_forward.1} parent=0 // pred_check_branch
    %17 = sbr.rel (0) target = $region13
  $region12: #{player_layer_forward.1} parent=0 // pred_region
    _
  $region13: #{player_layer_forward.1} parent=0 // pred_fallthru
    _
  // Predicated region
  $region14: #{player_layer_forward.1} parent=0 // pred_check
    _
  $region15: #{player_layer_forward.1} parent=0 // pred_check_branch
    %19 = sbr.rel (0) target = $region17
  $region16: #{player_layer_forward.1} parent=0 // pred_region
    _
  $region17: #{player_layer_forward.1} parent=0 // pred_fallthru
    _
  // Predicated region
  $region18: #{player_layer_forward.1} parent=0 // pred_check
    _
  $region19: #{player_layer_forward.1} parent=0 // pred_check_branch
    %21 = sbr.rel (0) target = $region21
  $region20: #{player_layer_forward.1} parent=0 // pred_region
    _
  $region21: #{player_layer_forward.1} parent=0 // pred_fallthru
    _
  // Predicated region
  $region22: #{player_layer_forward.1} parent=0 // pred_check
    _
  $region23: #{player_layer_forward.1} parent=0 // pred_check_branch
    %23 = sbr.rel (0) target = $region25
  $region24: #{player_layer_forward.1} parent=0 // pred_region
    _
  $region25: #{player_layer_forward.1} parent=0 // pred_fallthru
    _
  // Predicated region
  $region26: #{player_layer_forward.1} parent=0 // pred_check
    _
  $region27: #{player_layer_forward.1} parent=0 // pred_check_branch
    %25 = sbr.rel (0) target = $region29
  $region28: #{player_layer_forward.1} parent=0 // pred_region
    _
  $region29: #{player_layer_forward.1} parent=0 // pred_fallthru
    _
  %v26 = vld [vmem:[%s1] sm:$0xff]
  %v27 = vld [vmem:[%s1 + $0x8] sm:$0xff]
  %v28 = vld [vmem:[%s1 + $0x10] sm:$0xff]
  %v29 = vld [vmem:[%s1 + $0x18] sm:$0xff]
  %v30 = vld [vmem:[%s1 + $0x20] sm:$0xff]
  %v31 = vld [vmem:[%s1 + $0x28] sm:$0xff]
  %v32 = vld [vmem:[%s1 + $0x30] sm:$0xff]
  %v33 = vld [vmem:[%s1 + $0x38] sm:$0xff]
  %v34 = vld [vmem:[%s1 + $0x40] sm:$0xff]
  %v35 = vld [vmem:[%s1 + $0x48] sm:$0xff]
  %v36 = vld [vmem:[%s1 + $0x50] sm:$0xff]
  %v37 = vld [vmem:[%s1 + $0x58] sm:$0xff]
  %v38 = vld [vmem:[%s1 + $0x60] sm:$0xff]
  %v39 = vld [vmem:[%s1 + $0x68] sm:$0xff]
  %v40 = vld [vmem:[%s1 + $0x70] sm:$0xff]
  %v41 = vld [vmem:[%s1 + $0x78] sm:$0xff]
  %v42 = vld [vmem:[%s1 + $0x80] sm:$0xff]
  %v43 = vld [vmem:[%s1 + $0x88] sm:$0xff]
  %v44 = vld [vmem:[%s1 + $0x90] sm:$0xff]
  %v45 = vld [vmem:[%s1 + $0x98] sm:$0xff]
  %v46 = vld [vmem:[%s1 + $0xa0] sm:$0xff]
  %v47 = vld [vmem:[%s1 + $0xa8] sm:$0xff]
  %v48 = vld [vmem:[%s1 + $0xb0] sm:$0xff]
  %v49 = vld [vmem:[%s1 + $0xb8] sm:$0xff]
  %v50 = vld [vmem:[%s4] sm:$0xff]
  %v51 = vld [vmem:[%s4 + $0x8] sm:$0xff]
  %v52 = vld [vmem:[%s4 + $0x10] sm:$0xff]
  %v53 = vld [vmem:[%s4 + $0x18] sm:$0xff]
  %v54 = vld [vmem:[%s4 + $0x20] sm:$0xff]
  %v55 = vld [vmem:[%s4 + $0x28] sm:$0xff]
  %v56 = vld [vmem:[%s4 + $0x30] sm:$0xff]
  %v57 = vld [vmem:[%s4 + $0x38] sm:$0xff]
  %v58 = vld [vmem:[%s4 + $0x40] sm:$0xff]
  %v59 = vld [vmem:[%s4 + $0x48] sm:$0xff]
  %v60 = vld [vmem:[%s4 + $0x50] sm:$0xff]
  %v61 = vld [vmem:[%s4 + $0x58] sm:$0xff]
  %v62 = vld [vmem:[%s4 + $0x60] sm:$0xff]
  %v63 = vld [vmem:[%s4 + $0x68] sm:$0xff]
  %v64 = vld [vmem:[%s4 + $0x70] sm:$0xff]
  %v65 = vld [vmem:[%s4 + $0x78] sm:$0xff]
  %v66 = vld [vmem:[%s4 + $0x80] sm:$0xff]
  %v67 = vld [vmem:[%s4 + $0x88] sm:$0xff]
  %v68 = vld [vmem:[%s4 + $0x90] sm:$0xff]
  %v69 = vld [vmem:[%s4 + $0x98] sm:$0xff]
  %v70 = vld [vmem:[%s4 + $0xa0] sm:$0xff]
  %v71 = vld [vmem:[%s4 + $0xa8] sm:$0xff]
  %v72 = vld [vmem:[%s4 + $0xb0] sm:$0xff]
  %v73 = vld [vmem:[%s4 + $0xb8] sm:$0xff]
  %v74 = vld [vmem:[%s4 + $0xc0] sm:$0xff]
  %v75 = vld [vmem:[%s4 + $0xc8] sm:$0xff]
  %v76 = vld [vmem:[%s4 + $0xd0] sm:$0xff]
  %v77 = vld [vmem:[%s4 + $0xd8] sm:$0xff]
  %v78 = vld [vmem:[%s4 + $0xe0] sm:$0xff]
  %v79 = vld [vmem:[%s4 + $0xe8] sm:$0xff]
  %v80 = vld [vmem:[%s4 + $0xf0] sm:$0xff]
  %v81 = vld [vmem:[%s4 + $0xf8] sm:$0xff]
  %v82 = vld [vmem:[%s4 + $0x100] sm:$0xff]
  %v83 = vld [vmem:[%s4 + $0x108] sm:$0xff]
  %v84 = vld [vmem:[%s4 + $0x110] sm:$0xff]
  %v85 = vld [vmem:[%s4 + $0x118] sm:$0xff]
  %v86 = vld [vmem:[%s4 + $0x120] sm:$0xff]
  %v87 = vld [vmem:[%s4 + $0x128] sm:$0xff]
  %v88 = vld [vmem:[%s4 + $0x130] sm:$0xff]
  %v89 = vld [vmem:[%s4 + $0x138] sm:$0xff]
  %v90 = vld [vmem:[%s4 + $0x140] sm:$0xff]
  %v91 = vld [vmem:[%s4 + $0x148] sm:$0xff]
  %v92 = vld [vmem:[%s4 + $0x150] sm:$0xff]
  %v93 = vld [vmem:[%s4 + $0x158] sm:$0xff]
  %v94 = vld [vmem:[%s4 + $0x160] sm:$0xff]
  %v95 = vld [vmem:[%s4 + $0x168] sm:$0xff]
  %v96 = vld [vmem:[%s4 + $0x170] sm:$0xff]
  %v97 = vld [vmem:[%s4 + $0x178] sm:$0x7f]
  %v98 = vld [vmem:[%s0] sm:$0xff]
  %v99 = vld [vmem:[%s0 + $0x8] sm:$0xff]
  %v100 = vld [vmem:[%s0 + $0x10] sm:$0xff]
  %v101 = vld [vmem:[%s0 + $0x18] sm:$0xff]
  %v102 = vld [vmem:[%s0 + $0x20] sm:$0xff]
  %v103 = vld [vmem:[%s0 + $0x28] sm:$0xff]
  %v104 = vld [vmem:[%s0 + $0x30] sm:$0xff]
  %v105 = vld [vmem:[%s0 + $0x38] sm:$0xff]
  %v106 = vld [vmem:[%s3] sm:$0xff]
  %v107 = vld [vmem:[%s3 + $0x8] sm:$0xff]
  %v108 = vld [vmem:[%s3 + $0x10] sm:$0xff]
  %v109 = vld [vmem:[%s3 + $0x18] sm:$0xff]
  %vm110 = vcmask 261120
  %v112 = vsel %vm110, %v98, 0
  %v115 = vsel %vm110, %v99, 0
  %v118 = vsel %vm110, %v100, 0
  %v121 = vsel %vm110, %v101, 0
  %v124 = vsel %vm110, %v102, 0
  %v127 = vsel %vm110, %v103, 0
  %v130 = vsel %vm110, %v104, 0
  %v133 = vsel %vm110, %v105, 0
  %135 = vmatprep.subr.mxu0 0.0
  %136 = vmatpush1.msra.mxu0 %v106
  %137 = vmatprep.subr.mxu0 0.0
  %138 = vmatpush1.msra.mxu0 %v107
  %139 = vmatprep.subr.mxu0 0.0
  %140 = vmatpush1.msra.mxu0 %v108
  %141 = vmatprep.subr.mxu0 0.0
  %142 = vmatpush1.msra.mxu0 %v109
  %143 = vmatprep.subr.mxu0 0.0
  %144 = vmatpush1.msra.mxu0 0.0
  %145 = vmatprep.subr.mxu0 0.0
  %146 = vmatpush1.msra.mxu0 0.0
  %147 = vmatprep.subr.mxu0 0.0
  %148 = vmatpush1.msra.mxu0 0.0
  %149 = vmatprep.subr.mxu0 0.0
  %150 = vmatpush1.msra.mxu0 0.0
  %151 = vmatprep.subr.mxu0 0.0
  %152 = vmatpush1.msra.mxu0 0.0
  %153 = vmatprep.subr.mxu0 0.0
  %154 = vmatpush1.msra.mxu0 0.0
  %155 = vmatprep.subr.mxu0 0.0
  %156 = vmatpush1.msra.mxu0 0.0
  %157 = vmatprep.subr.mxu0 0.0
  %158 = vmatpush1.msra.mxu0 0.0
  %159 = vmatprep.subr.mxu0 0.0
  %160 = vmatpush1.msra.mxu0 0.0
  %161 = vmatprep.subr.mxu0 0.0
  %162 = vmatpush1.msra.mxu0 0.0
  %163 = vmatprep.subr.mxu0 0.0
  %164 = vmatpush1.msra.mxu0 0.0
  %165 = vmatprep.subr.mxu0 0.0
  %166 = vmatpush1.msra.mxu0 0.0
  %167 = vmatprep.subr.mxu0 0.0
  %168 = vmatpush1.msra.mxu0 0.0
  %169 = vmatprep.subr.mxu0 0.0
  %170 = vmatpush1.msra.mxu0 0.0
  %171 = vmatprep.subr.mxu0 0.0
  %172 = vmatpush1.msra.mxu0 0.0
  %173 = vmatprep.subr.mxu0 0.0
  %174 = vmatpush1.msra.mxu0 0.0
  %175 = vmatprep.subr.mxu0 0.0
  %176 = vmatpush1.msra.mxu0 0.0
  %177 = vmatprep.subr.mxu0 0.0
  %178 = vmatpush1.msra.mxu0 0.0
  %179 = vmatprep.subr.mxu0 0.0
  %180 = vmatpush1.msra.mxu0 0.0
  %181 = vmatprep.subr.mxu0 0.0
  %182 = vmatpush1.msra.mxu0 0.0
  %183 = vmatprep.subr.mxu0 0.0
  %184 = vmatpush1.msra.mxu0 0.0
  %185 = vmatprep.subr.mxu0 0.0
  %186 = vmatpush1.msra.mxu0 0.0
  %187 = vmatprep.subr.mxu0 0.0
  %188 = vmatpush1.msra.mxu0 0.0
  %189 = vmatprep.subr.mxu0 0.0
  %190 = vmatpush1.msra.mxu0 0.0
  %191 = vmatprep.subr.mxu0 0.0
  %192 = vmatpush1.msra.mxu0 0.0
  %193 = vmatprep.subr.mxu0 0.0
  %194 = vmatpush1.msra.mxu0 0.0
  %195 = vmatprep.subr.mxu0 0.0
  %196 = vmatpush1.msra.mxu0 0.0
  %197 = vmatprep.subr.mxu0 0.0
  %198 = vmatpush1.msra.mxu0 0.0
  %199 = vmatprep.mubr.f32.mxu0 0.0
  %200 = vmatmul.mubr.f32.gmra.mrb[0].mxu0 %v112
  %v201 = vpop.f32.mrb[0].mxu0
  %v202 = vadd.f32 0.0, %v201
  %v203 = vpop.f32.mrb[0].mxu0
  %204 = vmatprep.mubr.f32.mxu0 0.0
  %205 = vmatmul.mubr.f32.gmra.mrb[0].mxu0 %v115
  %v206 = vpop.f32.mrb[0].mxu0
  %v207 = vadd.f32 0.0, %v206
  %v208 = vpop.f32.mrb[0].mxu0
  %209 = vmatprep.mubr.f32.mxu0 0.0
  %210 = vmatmul.mubr.f32.gmra.mrb[0].mxu0 %v118
  %v211 = vpop.f32.mrb[0].mxu0
  %v212 = vadd.f32 0.0, %v211
  %v213 = vpop.f32.mrb[0].mxu0
  %214 = vmatprep.mubr.f32.mxu0 0.0
  %215 = vmatmul.mubr.f32.gmra.mrb[0].mxu0 %v121
  %v216 = vpop.f32.mrb[0].mxu0
  %v217 = vadd.f32 0.0, %v216
  %v218 = vpop.f32.mrb[0].mxu0
  %219 = vmatprep.mubr.f32.mxu0 0.0
  %220 = vmatmul.mubr.f32.gmra.mrb[0].mxu0 %v124
  %v221 = vpop.f32.mrb[0].mxu0
  %v222 = vadd.f32 0.0, %v221
  %v223 = vpop.f32.mrb[0].mxu0
  %224 = vmatprep.mubr.f32.mxu0 0.0
  %225 = vmatmul.mubr.f32.gmra.mrb[0].mxu0 %v127
  %v226 = vpop.f32.mrb[0].mxu0
  %v227 = vadd.f32 0.0, %v226
  %v228 = vpop.f32.mrb[0].mxu0
  %229 = vmatprep.mubr.f32.mxu0 0.0
  %230 = vmatmul.mubr.f32.gmra.mrb[0].mxu0 %v130
  %v231 = vpop.f32.mrb[0].mxu0
  %v232 = vadd.f32 0.0, %v231
  %v233 = vpop.f32.mrb[0].mxu0
  %234 = vmatprep.mubr.f32.mxu0 0.0
  %235 = vmatmul.mubr.f32.gmra.mrb[0].mxu0 %v133
  %v236 = vpop.f32.mrb[0].mxu0
  %v237 = vadd.f32 0.0, %v236
  %v238 = vpop.f32.mrb[0].mxu0
  %239 = vdwg.mxu0
  %vm240 = vcmask 1039360
  %v242 = vsel %vm240, %v28, 0
  %v245 = vsel %vm240, %v31, 0
  %v248 = vsel %vm240, %v34, 0
  %v251 = vsel %vm240, %v37, 0
  %v254 = vsel %vm240, %v40, 0
  %v257 = vsel %vm240, %v43, 0
  %v260 = vsel %vm240, %v46, 0
  %v263 = vsel %vm240, %v49, 0
  %vm265 = vcmask 1046528
  %v267 = vsel %vm265, %v97, 0
  %269 = vmatprep.subr.mxu0 0.0
  %270 = vmatpush1.msra.mxu0 %v50
  %271 = vmatprep.subr.mxu0 0.0
  %272 = vmatpush1.msra.mxu0 %v51
  %273 = vmatprep.subr.mxu0 0.0
  %274 = vmatpush1.msra.mxu0 %v52
  %275 = vmatprep.subr.mxu0 0.0
  %276 = vmatpush1.msra.mxu0 %v53
  %277 = vmatprep.subr.mxu0 0.0
  %278 = vmatpush1.msra.mxu0 %v54
  %279 = vmatprep.subr.mxu0 0.0
  %280 = vmatpush1.msra.mxu0 %v55
  %281 = vmatprep.subr.mxu0 0.0
  %282 = vmatpush1.msra.mxu0 %v56
  %283 = vmatprep.subr.mxu0 0.0
  %284 = vmatpush1.msra.mxu0 %v57
  %285 = vmatprep.subr.mxu0 0.0
  %286 = vmatpush1.msra.mxu0 %v58
  %287 = vmatprep.subr.mxu0 0.0
  %288 = vmatpush1.msra.mxu0 %v59
  %289 = vmatprep.subr.mxu0 0.0
  %290 = vmatpush1.msra.mxu0 %v60
  %291 = vmatprep.subr.mxu0 0.0
  %292 = vmatpush1.msra.mxu0 %v61
  %293 = vmatprep.subr.mxu0 0.0
  %294 = vmatpush1.msra.mxu0 %v62
  %295 = vmatprep.subr.mxu0 0.0
  %296 = vmatpush1.msra.mxu0 %v63
  %297 = vmatprep.subr.mxu0 0.0
  %298 = vmatpush1.msra.mxu0 %v64
  %299 = vmatprep.subr.mxu0 0.0
  %300 = vmatpush1.msra.mxu0 %v65
  %301 = vmatprep.subr.mxu0 0.0
  %302 = vmatpush1.msra.mxu0 %v66
  %303 = vmatprep.subr.mxu0 0.0
  %304 = vmatpush1.msra.mxu0 %v67
  %305 = vmatprep.subr.mxu0 0.0
  %306 = vmatpush1.msra.mxu0 %v68
  %307 = vmatprep.subr.mxu0 0.0
  %308 = vmatpush1.msra.mxu0 %v69
  %309 = vmatprep.subr.mxu0 0.0
  %310 = vmatpush1.msra.mxu0 %v70
  %311 = vmatprep.subr.mxu0 0.0
  %312 = vmatpush1.msra.mxu0 %v71
  %313 = vmatprep.subr.mxu0 0.0
  %314 = vmatpush1.msra.mxu0 %v72
  %315 = vmatprep.subr.mxu0 0.0
  %316 = vmatpush1.msra.mxu0 %v73
  %317 = vmatprep.subr.mxu0 0.0
  %318 = vmatpush1.msra.mxu0 %v74
  %319 = vmatprep.subr.mxu0 0.0
  %320 = vmatpush1.msra.mxu0 %v75
  %321 = vmatprep.subr.mxu0 0.0
  %322 = vmatpush1.msra.mxu0 %v76
  %323 = vmatprep.subr.mxu0 0.0
  %324 = vmatpush1.msra.mxu0 %v77
  %325 = vmatprep.subr.mxu0 0.0
  %326 = vmatpush1.msra.mxu0 %v78
  %327 = vmatprep.subr.mxu0 0.0
  %328 = vmatpush1.msra.mxu0 %v79
  %329 = vmatprep.subr.mxu0 0.0
  %330 = vmatpush1.msra.mxu0 %v80
  %331 = vmatprep.subr.mxu0 0.0
  %332 = vmatpush1.msra.mxu0 %v81
  %333 = vmatprep.mubr.f32.mxu0 %v27
  %334 = vmatmul.mubr.f32.gmra.mrb[0].mxu0 %v26
  %v335 = vpop.f32.mrb[0].mxu0
  %v336 = vadd.f32 %v202, %v335
  %v337 = vpop.f32.mrb[0].mxu0
  %338 = vmatprep.mubr.f32.mxu0 %v30
  %339 = vmatmul.mubr.f32.gmra.mrb[0].mxu0 %v29
  %v340 = vpop.f32.mrb[0].mxu0
  %v341 = vadd.f32 %v207, %v340
  %v342 = vpop.f32.mrb[0].mxu0
  %343 = vmatprep.mubr.f32.mxu0 %v33
  %344 = vmatmul.mubr.f32.gmra.mrb[0].mxu0 %v32
  %v345 = vpop.f32.mrb[0].mxu0
  %v346 = vadd.f32 %v212, %v345
  %v347 = vpop.f32.mrb[0].mxu0
  %348 = vmatprep.mubr.f32.mxu0 %v36
  %349 = vmatmul.mubr.f32.gmra.mrb[0].mxu0 %v35
  %v350 = vpop.f32.mrb[0].mxu0
  %v351 = vadd.f32 %v217, %v350
  %v352 = vpop.f32.mrb[0].mxu0
  %353 = vmatprep.mubr.f32.mxu0 %v39
  %354 = vmatmul.mubr.f32.gmra.mrb[0].mxu0 %v38
  %v355 = vpop.f32.mrb[0].mxu0
  %v356 = vadd.f32 %v222, %v355
  %v357 = vpop.f32.mrb[0].mxu0
  %358 = vmatprep.mubr.f32.mxu0 %v42
  %359 = vmatmul.mubr.f32.gmra.mrb[0].mxu0 %v41
  %v360 = vpop.f32.mrb[0].mxu0
  %v361 = vadd.f32 %v227, %v360
  %v362 = vpop.f32.mrb[0].mxu0
  %363 = vmatprep.mubr.f32.mxu0 %v45
  %364 = vmatmul.mubr.f32.gmra.mrb[0].mxu0 %v44
  %v365 = vpop.f32.mrb[0].mxu0
  %v366 = vadd.f32 %v232, %v365
  %v367 = vpop.f32.mrb[0].mxu0
  %368 = vmatprep.mubr.f32.mxu0 %v48
  %369 = vmatmul.mubr.f32.gmra.mrb[0].mxu0 %v47
  %v370 = vpop.f32.mrb[0].mxu0
  %v371 = vadd.f32 %v237, %v370
  %v372 = vpop.f32.mrb[0].mxu0
  %373 = vdwg.mxu0
  %374 = vmatprep.subr.mxu0 0.0
  %375 = vmatpush1.msra.mxu0 %v82
  %376 = vmatprep.subr.mxu0 0.0
  %377 = vmatpush1.msra.mxu0 %v83
  %378 = vmatprep.subr.mxu0 0.0
  %379 = vmatpush1.msra.mxu0 %v84
  %380 = vmatprep.subr.mxu0 0.0
  %381 = vmatpush1.msra.mxu0 %v85
  %382 = vmatprep.subr.mxu0 0.0
  %383 = vmatpush1.msra.mxu0 %v86
  %384 = vmatprep.subr.mxu0 0.0
  %385 = vmatpush1.msra.mxu0 %v87
  %386 = vmatprep.subr.mxu0 0.0
  %387 = vmatpush1.msra.mxu0 %v88
  %388 = vmatprep.subr.mxu0 0.0
  %389 = vmatpush1.msra.mxu0 %v89
  %390 = vmatprep.subr.mxu0 0.0
  %391 = vmatpush1.msra.mxu0 %v90
  %392 = vmatprep.subr.mxu0 0.0
  %393 = vmatpush1.msra.mxu0 %v91
  %394 = vmatprep.subr.mxu0 0.0
  %395 = vmatpush1.msra.mxu0 %v92
  %396 = vmatprep.subr.mxu0 0.0
  %397 = vmatpush1.msra.mxu0 %v93
  %398 = vmatprep.subr.mxu0 0.0
  %399 = vmatpush1.msra.mxu0 %v94
  %400 = vmatprep.subr.mxu0 0.0
  %401 = vmatpush1.msra.mxu0 %v95
  %402 = vmatprep.subr.mxu0 0.0
  %403 = vmatpush1.msra.mxu0 %v96
  %404 = vmatprep.subr.mxu0 0.0
  %405 = vmatpush1.msra.mxu0 %v267
  %406 = vmatprep.subr.mxu0 0.0
  %407 = vmatpush1.msra.mxu0 0.0
  %408 = vmatprep.subr.mxu0 0.0
  %409 = vmatpush1.msra.mxu0 0.0
  %410 = vmatprep.subr.mxu0 0.0
  %411 = vmatpush1.msra.mxu0 0.0
  %412 = vmatprep.subr.mxu0 0.0
  %413 = vmatpush1.msra.mxu0 0.0
  %414 = vmatprep.subr.mxu0 0.0
  %415 = vmatpush1.msra.mxu0 0.0
  %416 = vmatprep.subr.mxu0 0.0
  %417 = vmatpush1.msra.mxu0 0.0
  %418 = vmatprep.subr.mxu0 0.0
  %419 = vmatpush1.msra.mxu0 0.0
  %420 = vmatprep.subr.mxu0 0.0
  %421 = vmatpush1.msra.mxu0 0.0
  %422 = vmatprep.subr.mxu0 0.0
  %423 = vmatpush1.msra.mxu0 0.0
  %424 = vmatprep.subr.mxu0 0.0
  %425 = vmatpush1.msra.mxu0 0.0
  %426 = vmatprep.subr.mxu0 0.0
  %427 = vmatpush1.msra.mxu0 0.0
  %428 = vmatprep.subr.mxu0 0.0
  %429 = vmatpush1.msra.mxu0 0.0
  %430 = vmatprep.subr.mxu0 0.0
  %431 = vmatpush1.msra.mxu0 0.0
  %432 = vmatprep.subr.mxu0 0.0
  %433 = vmatpush1.msra.mxu0 0.0
  %434 = vmatprep.subr.mxu0 0.0
  %435 = vmatpush1.msra.mxu0 0.0
  %436 = vmatprep.subr.mxu0 0.0
  %437 = vmatpush1.msra.mxu0 0.0
  %438 = vmatprep.mubr.f32.mxu0 0.0
  %439 = vmatmul.mubr.f32.gmra.mrb[0].mxu0 %v242
  %v440 = vpop.f32.mrb[0].mxu0
  %v441 = vadd.f32 %v336, %v440
  %v442 = vpop.f32.mrb[0].mxu0
  %443 = vmatprep.mubr.f32.mxu0 0.0
  %444 = vmatmul.mubr.f32.gmra.mrb[0].mxu0 %v245
  %v445 = vpop.f32.mrb[0].mxu0
  %v446 = vadd.f32 %v341, %v445
  %v447 = vpop.f32.mrb[0].mxu0
  %448 = vmatprep.mubr.f32.mxu0 0.0
  %449 = vmatmul.mubr.f32.gmra.mrb[0].mxu0 %v248
  %v450 = vpop.f32.mrb[0].mxu0
  %v451 = vadd.f32 %v346, %v450
  %v452 = vpop.f32.mrb[0].mxu0
  %453 = vmatprep.mubr.f32.mxu0 0.0
  %454 = vmatmul.mubr.f32.gmra.mrb[0].mxu0 %v251
  %v455 = vpop.f32.mrb[0].mxu0
  %v456 = vadd.f32 %v351, %v455
  %v457 = vpop.f32.mrb[0].mxu0
  %458 = vmatprep.mubr.f32.mxu0 0.0
  %459 = vmatmul.mubr.f32.gmra.mrb[0].mxu0 %v254
  %v460 = vpop.f32.mrb[0].mxu0
  %v461 = vadd.f32 %v356, %v460
  %v462 = vpop.f32.mrb[0].mxu0
  %463 = vmatprep.mubr.f32.mxu0 0.0
  %464 = vmatmul.mubr.f32.gmra.mrb[0].mxu0 %v257
  %v465 = vpop.f32.mrb[0].mxu0
  %v466 = vadd.f32 %v361, %v465
  %v467 = vpop.f32.mrb[0].mxu0
  %468 = vmatprep.mubr.f32.mxu0 0.0
  %469 = vmatmul.mubr.f32.gmra.mrb[0].mxu0 %v260
  %v470 = vpop.f32.mrb[0].mxu0
  %v471 = vadd.f32 %v366, %v470
  %v472 = vpop.f32.mrb[0].mxu0
  %473 = vmatprep.mubr.f32.mxu0 0.0
  %474 = vmatmul.mubr.f32.gmra.mrb[0].mxu0 %v263
  %v475 = vpop.f32.mrb[0].mxu0
  %v476 = vadd.f32 %v371, %v475
  %v477 = vpop.f32.mrb[0].mxu0
  %478 = vdwg.mxu0
  %v479 = vld [vmem:[%s2] sm:$0xff]
  %v480 = vld [vmem:[%s2 + $0x8] sm:$0xff]
  %v481 = vld [vmem:[%s2 + $0x10] sm:$0xff]
  %v482 = vld [vmem:[%s2 + $0x18] sm:$0xff]
  %v483 = vld [vmem:[%s2 + $0x20] sm:$0xff]
  %v484 = vld [vmem:[%s2 + $0x28] sm:$0xff]
  %v485 = vld [vmem:[%s2 + $0x30] sm:$0xff]
  %v486 = vld [vmem:[%s2 + $0x38] sm:$0xff]
  %v487 = vld [vmem:[%s5] sm:$0xff]
  %v488 = vld [vmem:[%s5 + $0x8] sm:$0x3]
  %vm489 = vcmask 80896
  %v491 = vsel %vm489, %v479, 0
  %v494 = vsel %vm489, %v480, 0
  %v497 = vsel %vm489, %v481, 0
  %v500 = vsel %vm489, %v482, 0
  %v503 = vsel %vm489, %v483, 0
  %v506 = vsel %vm489, %v484, 0
  %v509 = vsel %vm489, %v485, 0
  %v512 = vsel %vm489, %v486, 0
  %vm514 = vcmask 1041408
  %v516 = vsel %vm514, %v488, 0
  %518 = vmatprep.subr.mxu0 0.0
  %519 = vmatpush1.msra.mxu0 %v487
  %520 = vmatprep.subr.mxu0 0.0
  %521 = vmatpush1.msra.mxu0 %v516
  %522 = vmatprep.subr.mxu0 0.0
  %523 = vmatpush1.msra.mxu0 0.0
  %524 = vmatprep.subr.mxu0 0.0
  %525 = vmatpush1.msra.mxu0 0.0
  %526 = vmatprep.subr.mxu0 0.0
  %527 = vmatpush1.msra.mxu0 0.0
  %528 = vmatprep.subr.mxu0 0.0
  %529 = vmatpush1.msra.mxu0 0.0
  %530 = vmatprep.subr.mxu0 0.0
  %531 = vmatpush1.msra.mxu0 0.0
  %532 = vmatprep.subr.mxu0 0.0
  %533 = vmatpush1.msra.mxu0 0.0
  %534 = vmatprep.subr.mxu0 0.0
  %535 = vmatpush1.msra.mxu0 0.0
  %536 = vmatprep.subr.mxu0 0.0
  %537 = vmatpush1.msra.mxu0 0.0
  %538 = vmatprep.subr.mxu0 0.0
  %539 = vmatpush1.msra.mxu0 0.0
  %540 = vmatprep.subr.mxu0 0.0
  %541 = vmatpush1.msra.mxu0 0.0
  %542 = vmatprep.subr.mxu0 0.0
  %543 = vmatpush1.msra.mxu0 0.0
  %544 = vmatprep.subr.mxu0 0.0
  %545 = vmatpush1.msra.mxu0 0.0
  %546 = vmatprep.subr.mxu0 0.0
  %547 = vmatpush1.msra.mxu0 0.0
  %548 = vmatprep.subr.mxu0 0.0
  %549 = vmatpush1.msra.mxu0 0.0
  %550 = vmatprep.subr.mxu0 0.0
  %551 = vmatpush1.msra.mxu0 0.0
  %552 = vmatprep.subr.mxu0 0.0
  %553 = vmatpush1.msra.mxu0 0.0
  %554 = vmatprep.subr.mxu0 0.0
  %555 = vmatpush1.msra.mxu0 0.0
  %556 = vmatprep.subr.mxu0 0.0
  %557 = vmatpush1.msra.mxu0 0.0
  %558 = vmatprep.subr.mxu0 0.0
  %559 = vmatpush1.msra.mxu0 0.0
  %560 = vmatprep.subr.mxu0 0.0
  %561 = vmatpush1.msra.mxu0 0.0
  %562 = vmatprep.subr.mxu0 0.0
  %563 = vmatpush1.msra.mxu0 0.0
  %564 = vmatprep.subr.mxu0 0.0
  %565 = vmatpush1.msra.mxu0 0.0
  %566 = vmatprep.subr.mxu0 0.0
  %567 = vmatpush1.msra.mxu0 0.0
  %568 = vmatprep.subr.mxu0 0.0
  %569 = vmatpush1.msra.mxu0 0.0
  %570 = vmatprep.subr.mxu0 0.0
  %571 = vmatpush1.msra.mxu0 0.0
  %572 = vmatprep.subr.mxu0 0.0
  %573 = vmatpush1.msra.mxu0 0.0
  %574 = vmatprep.subr.mxu0 0.0
  %575 = vmatpush1.msra.mxu0 0.0
  %576 = vmatprep.subr.mxu0 0.0
  %577 = vmatpush1.msra.mxu0 0.0
  %578 = vmatprep.subr.mxu0 0.0
  %579 = vmatpush1.msra.mxu0 0.0
  %580 = vmatprep.subr.mxu0 0.0
  %581 = vmatpush1.msra.mxu0 0.0
  %582 = vmatprep.mubr.f32.mxu0 0.0
  %583 = vmatmul.mubr.f32.gmra.mrb[0].mxu0 %v491
  %v584 = vpop.f32.mrb[0].mxu0
  %v585 = vadd.f32 0.0, %v584
  %v586 = vpop.f32.mrb[0].mxu0
  %587 = vmatprep.mubr.f32.mxu0 0.0
  %588 = vmatmul.mubr.f32.gmra.mrb[0].mxu0 %v494
  %v589 = vpop.f32.mrb[0].mxu0
  %v590 = vadd.f32 0.0, %v589
  %v591 = vpop.f32.mrb[0].mxu0
  %592 = vmatprep.mubr.f32.mxu0 0.0
  %593 = vmatmul.mubr.f32.gmra.mrb[0].mxu0 %v497
  %v594 = vpop.f32.mrb[0].mxu0
  %v595 = vadd.f32 0.0, %v594
  %v596 = vpop.f32.mrb[0].mxu0
  %597 = vmatprep.mubr.f32.mxu0 0.0
  %598 = vmatmul.mubr.f32.gmra.mrb[0].mxu0 %v500
  %v599 = vpop.f32.mrb[0].mxu0
  %v600 = vadd.f32 0.0, %v599
  %v601 = vpop.f32.mrb[0].mxu0
  %602 = vmatprep.mubr.f32.mxu0 0.0
  %603 = vmatmul.mubr.f32.gmra.mrb[0].mxu0 %v503
  %v604 = vpop.f32.mrb[0].mxu0
  %v605 = vadd.f32 0.0, %v604
  %v606 = vpop.f32.mrb[0].mxu0
  %607 = vmatprep.mubr.f32.mxu0 0.0
  %608 = vmatmul.mubr.f32.gmra.mrb[0].mxu0 %v506
  %v609 = vpop.f32.mrb[0].mxu0
  %v610 = vadd.f32 0.0, %v609
  %v611 = vpop.f32.mrb[0].mxu0
  %612 = vmatprep.mubr.f32.mxu0 0.0
  %613 = vmatmul.mubr.f32.gmra.mrb[0].mxu0 %v509
  %v614 = vpop.f32.mrb[0].mxu0
  %v615 = vadd.f32 0.0, %v614
  %v616 = vpop.f32.mrb[0].mxu0
  %617 = vmatprep.mubr.f32.mxu0 0.0
  %618 = vmatmul.mubr.f32.gmra.mrb[0].mxu0 %v512
  %v619 = vpop.f32.mrb[0].mxu0
  %v620 = vadd.f32 0.0, %v619
  %v621 = vpop.f32.mrb[0].mxu0
  %622 = vdwg.mxu0
  %v623 = vadd.f32 %v441, %v585
  %v624 = vadd.f32 %v446, %v590
  %v625 = vadd.f32 %v451, %v595
  %v626 = vadd.f32 %v456, %v600
  %v627 = vadd.f32 %v461, %v605
  %v628 = vadd.f32 %v466, %v610
  %v629 = vadd.f32 %v471, %v615
  %v630 = vadd.f32 %v476, %v620
  %v631 = vld [vmem:[%s6] sm:$0x1]
  %v633 = vlaneseq
  %v634 = vshrl.u32 %v633, 7
  %v635 = vsub.s32 0, %v634
  %v636 = vrot.slane %v631, %v635
  %v638 = vadd.f32 %v623, %v636
  %v639 = vadd.f32 %v624, %v636
  %v640 = vadd.f32 %v625, %v636
  %v641 = vadd.f32 %v626, %v636
  %v642 = vadd.f32 %v627, %v636
  %v643 = vadd.f32 %v628, %v636
  %v644 = vadd.f32 %v629, %v636
  %v645 = vadd.f32 %v630, %v636
  %vm646 = vcmask 130048
  %647 = vst.msk [vmem:[%s7] sm:$0xff] %vm646, %v638
  %648 = vst.msk [vmem:[%s7 + $0x8] sm:$0xff] %vm646, %v639
  %649 = vst.msk [vmem:[%s7 + $0x10] sm:$0xff] %vm646, %v640
  %650 = vst.msk [vmem:[%s7 + $0x18] sm:$0xff] %vm646, %v641
  %651 = vst.msk [vmem:[%s7 + $0x20] sm:$0xff] %vm646, %v642
  %652 = vst.msk [vmem:[%s7 + $0x28] sm:$0xff] %vm646, %v643
  %653 = vst.msk [vmem:[%s7 + $0x30] sm:$0xff] %vm646, %v644
  %654 = vst.msk [vmem:[%s7 + $0x38] sm:$0xff] %vm646, %v645
  // Predicated region
  $region30: #{player_layer_forward.1} parent=0 // pred_check
    _
  $region31: #{player_layer_forward.1} parent=0 // pred_check_branch
    %656 = sbr.rel (0) target = $region33
  $region32: #{player_layer_forward.1} parent=0 // pred_region
    _
  $region33: #{player_layer_forward.1} parent=0 // pred_fallthru
    _
  // Predicated region
  $region34: #{player_layer_forward.1} parent=0 // pred_check
    _
  $region35: #{player_layer_forward.1} parent=0 // pred_check_branch
    %658 = sbr.rel (0) target = $region37
  $region36: #{player_layer_forward.1} parent=0 // pred_region
    _
  $region37: #{player_layer_forward.1} parent=0 // pred_fallthru
    _

</llo_original>
